<compile_context>
chip_gen: v7x
topology: tpu7x:2x2x1
jax: 0.10.0
libtpu: 0.0.40
codegen_flags: <defaults>
</compile_context>

<pallas_src>
import functools
import math

import jax
import jax.numpy as jnp
from jax.experimental import pallas as pl
from jax.experimental.pallas import tpu as pltpu

# Padded channel widths (real widths in comments).
K_STEM = 32      # 3x3x3 = 27 input patch features, padded to 32
C_STEM = 128     # 40
C_EXP = 256      # 240
C_HEAD = 1536    # 1536 (already lane aligned)
R_STEM, R_EXP, R_SE, N_CLS = 40, 240, 10, 7


def _pick_tile(m, candidates=(1024, 512, 256, 128, 64, 32, 16, 8)):
    for t in candidates:
        if m % t == 0:
            return t
    raise ValueError(f"row count {m} must be a multiple of 8")


def _silu_f32(y):
    # y * sigmoid(y); exp + reciprocal land on the EUP slot, mul/add on the VPU.
    return y * pl.reciprocal(1.0 + jnp.exp(-y), approx=True)


# ----------------------------------------------------------------------------
# Pallas kernels
# ----------------------------------------------------------------------------

def _mm_bn_act_kernel(a_ref, b_ref, s_ref, c_ref, o_ref, *, act):
    """[tm,K]@[K,tn] on the MXU (bf16 in, f32 acc) + folded BN (+ SiLU) epilogue."""
    acc = jnp.dot(a_ref[...], b_ref[...], preferred_element_type=jnp.float32)
    y = acc * s_ref[...] + c_ref[...]
    if act:
        y = _silu_f32(y)
    o_ref[...] = y.astype(o_ref.dtype)


def matmul_bn_act(a, b, scale, bias, act):
    """a: [M,K] bf16, b: [K,Nc] bf16, scale/bias: [1,Nc] f32 -> [M,Nc] bf16."""
    M, K = a.shape
    K2, Nc = b.shape
    assert K == K2
    tm = _pick_tile(M)
    tn = Nc if Nc <= 1024 else 512
    assert Nc % tn == 0
    return pl.pallas_call(
        functools.partial(_mm_bn_act_kernel, act=act),
        out_shape=jax.ShapeDtypeStruct((M, Nc), jnp.bfloat16),
        grid=(M // tm, Nc // tn),
        in_specs=[pl.BlockSpec((tm, K), lambda i, j: (i, 0)),
                  pl.BlockSpec((K, tn), lambda i, j: (0, j)),
                  pl.BlockSpec((1, tn), lambda i, j: (0, j)),
                  pl.BlockSpec((1, tn), lambda i, j: (0, j))],
        out_specs=pl.BlockSpec((tm, tn), lambda i, j: (i, j)),
        compiler_params=pltpu.CompilerParams(
            dimension_semantics=("parallel", "parallel")),
    )(a, b, scale, bias)


def _dw_kernel(h_ref, w_ref, s_ref, b_ref, o_ref, gap_ref, *, H, W):
    """Depthwise 3x3 (stride 1, pad 1) + BN + SiLU + per-image GAP, one image/step.

    Spatial is flattened on the sublane axis; the 9 taps are sublane rotations
    (pltpu.roll -> XLU slot) with edge masks, so the multiply-adds stay on the VPU.
    """
    HW = H * W
    x = h_ref[0].astype(jnp.float32)                  # (HW, C)
    w = w_ref[...]                                    # (9, C) f32
    idx = jax.lax.broadcasted_iota(jnp.int32, (HW, 1), 0)
    row = idx // W
    col = idx - row * W
    acc = jnp.zeros_like(x)
    for di in range(3):
        for dj in range(3):
            shift = (di - 1) * W + (dj - 1)
            shifted = x if shift == 0 else pltpu.roll(x, shift=(-shift) % HW, axis=0)
            # Only mask taps that can actually run off the edge (center row/col
            # taps are always in-bounds along that axis) -> fewer VPU ops.
            masks = []
            if di != 1:
                masks.append(jnp.logical_and(row + (di - 1) >= 0, row + (di - 1) < H))
            if dj != 1:
                masks.append(jnp.logical_and(col + (dj - 1) >= 0, col + (dj - 1) < W))
            if masks:
                m = masks[0] if len(masks) == 1 else jnp.logical_and(masks[0], masks[1])
                shifted = jnp.where(m, shifted, 0.0)  # one select instead of mask-mul
            acc = acc + shifted * w[di * 3 + dj:di * 3 + dj + 1, :]
    y = acc * s_ref[...] + b_ref[...]
    y = _silu_f32(y)
    o_ref[0] = y.astype(o_ref.dtype)
    gap_ref[...] = jnp.mean(y, axis=0, keepdims=True)  # fused SE global-avg-pool


def dw3x3_bn_silu_gap(h, w, scale, bias, H, W):
    """h: [N,HW,C] bf16 -> ([N,HW,C] bf16, [N,C] f32 GAP)."""
    N, HW, C = h.shape
    return pl.pallas_call(
        functools.partial(_dw_kernel, H=H, W=W),
        out_shape=(jax.ShapeDtypeStruct((N, HW, C), jnp.bfloat16),
                   jax.ShapeDtypeStruct((N, C), jnp.float32)),
        grid=(N,),
        in_specs=[pl.BlockSpec((1, HW, C), lambda n: (n, 0, 0)),
                  pl.BlockSpec((9, C), lambda n: (0, 0)),
                  pl.BlockSpec((1, C), lambda n: (0, 0)),
                  pl.BlockSpec((1, C), lambda n: (0, 0))],
        out_specs=[pl.BlockSpec((1, HW, C), lambda n: (n, 0, 0)),
                   pl.BlockSpec((1, C), lambda n: (n, 0))],
        compiler_params=pltpu.CompilerParams(dimension_semantics=("parallel",)),
    )(h, w, scale, bias)


def _proj_kernel(h_ref, g_ref, w_ref, s_ref, b_ref, r_ref, o_ref):
    """SE-gate * 1x1 projection (MXU) + BN + residual add, one image per step."""
    hg = (h_ref[0].astype(jnp.float32) * g_ref[...]).astype(jnp.bfloat16)
    acc = jnp.dot(hg, w_ref[...], preferred_element_type=jnp.float32)
    y = acc * s_ref[...] + b_ref[...] + r_ref[0].astype(jnp.float32)
    o_ref[0] = y.astype(o_ref.dtype)


def proj_gate_residual(h, gate, w, scale, bias, res):
    N, HW, CE = h.shape
    CS = w.shape[1]
    return pl.pallas_call(
        _proj_kernel,
        out_shape=jax.ShapeDtypeStruct((N, HW, CS), jnp.bfloat16),
        grid=(N,),
        in_specs=[pl.BlockSpec((1, HW, CE), lambda n: (n, 0, 0)),
                  pl.BlockSpec((1, CE), lambda n: (n, 0)),
                  pl.BlockSpec((CE, CS), lambda n: (0, 0)),
                  pl.BlockSpec((1, CS), lambda n: (0, 0)),
                  pl.BlockSpec((1, CS), lambda n: (0, 0)),
                  pl.BlockSpec((1, HW, CS), lambda n: (n, 0, 0))],
        out_specs=pl.BlockSpec((1, HW, CS), lambda n: (n, 0, 0)),
        compiler_params=pltpu.CompilerParams(dimension_semantics=("parallel",)),
    )(h, gate, w, scale, bias, res)


def _head_gap_kernel(x_ref, w_ref, s_ref, b_ref, o_ref):
    """Head 1x1 conv (MXU) + BN + SiLU + global average pool; the [HW,1536]
    activation lives only in VMEM and is never written to HBM."""
    acc = jnp.dot(x_ref[0], w_ref[...], preferred_element_type=jnp.float32)
    y = acc * s_ref[...] + b_ref[...]
    y = _silu_f32(y)
    o_ref[...] = jnp.mean(y, axis=0, keepdims=True)


def head_bn_silu_gap(x, w, scale, bias):
    N, HW, CS = x.shape
    CH = w.shape[1]
    return pl.pallas_call(
        _head_gap_kernel,
        out_shape=jax.ShapeDtypeStruct((N, CH), jnp.float32),
        grid=(N,),
        in_specs=[pl.BlockSpec((1, HW, CS), lambda n: (n, 0, 0)),
                  pl.BlockSpec((CS, CH), lambda n: (0, 0)),
                  pl.BlockSpec((1, CH), lambda n: (0, 0)),
                  pl.BlockSpec((1, CH), lambda n: (0, 0))],
        out_specs=pl.BlockSpec((1, CH), lambda n: (n, 0)),
        compiler_params=pltpu.CompilerParams(dimension_semantics=("parallel",)),
    )(x, w, scale, bias)


def _ce_kernel(logits_ref, onehot_ref, loss_ref):
    lg = logits_ref[...]                              # (N, K)
    m = jnp.max(lg, axis=-1, keepdims=True)
    lse = m + jnp.log(jnp.sum(jnp.exp(lg - m), axis=-1, keepdims=True))
    tgt = jnp.sum(onehot_ref[...] * lg, axis=-1, keepdims=True)
    per = lse - tgt
    loss_ref[...] = jnp.sum(per, axis=0, keepdims=True) / per.shape[0]


def cross_entropy_loss(logits, onehot):
    loss = pl.pallas_call(
        _ce_kernel,
        out_shape=jax.ShapeDtypeStruct((1, 1), jnp.float32),
    )(logits, onehot)
    return loss[0, 0]


# ----------------------------------------------------------------------------
# Plain-JAX glue (patch extraction, parameter setup, SE MLP, classifier)
# ----------------------------------------------------------------------------

def im2col_stem(x, k_pad):
    """Stem 3x3 stride-2 pad-1 patches: [N,H,W,3] -> ([N*Ho*Wo, k_pad] bf16, dims)."""
    N, H, W, C = x.shape
    xp = jnp.pad(x, ((0, 0), (1, 1), (1, 1), (0, 0)))
    Ho = (H + 2 - 3) // 2 + 1
    Wo = (W + 2 - 3) // 2 + 1
    cols = []
    for di in range(3):
        for dj in range(3):
            cols.append(xp[:, di:di + Ho * 2:2, dj:dj + Wo * 2:2, :])
    cols.append(jnp.zeros((N, Ho, Wo, k_pad - 9 * C), x.dtype))   # pad K in place
    patches = jnp.concatenate(cols, axis=-1)
    return patches.reshape(N * Ho * Wo, k_pad).astype(jnp.bfloat16), (N, Ho, Wo)


def init_params(key):
    """Deterministic synthetic weights, channel-padded once, MXU weights in bf16."""
    def dense(k, fan_in, shape):
        return jax.random.normal(k, shape, jnp.float32) / math.sqrt(fan_in)

    def pad2(w, shape):
        return jnp.zeros(shape, jnp.float32).at[:w.shape[0], :w.shape[1]].set(w)

    def bn(c_real, c_pad):   # folded BN: scale=1/bias=0 on real channels, 0 on pad
        return (jnp.zeros((1, c_pad), jnp.float32).at[0, :c_real].set(1.0),
                jnp.zeros((1, c_pad), jnp.float32))

    ks = jax.random.split(key, 8)
    stem_s, stem_b = bn(R_STEM, C_STEM)
    exp_s, exp_b = bn(R_EXP, C_EXP)
    dw_s, dw_b = bn(R_EXP, C_EXP)
    proj_s, proj_b = bn(R_STEM, C_STEM)
    head_s, head_b = bn(C_HEAD, C_HEAD)
    p = {
        "stem_w": pad2(dense(ks[0], 27, (27, R_STEM)), (K_STEM, C_STEM)).astype(jnp.bfloat16),
        "stem_s": stem_s, "stem_b": stem_b,
        "exp_w": pad2(dense(ks[1], R_STEM, (R_STEM, R_EXP)), (C_STEM, C_EXP)).astype(jnp.bfloat16),
        "exp_s": exp_s, "exp_b": exp_b,
        "dw_w": jnp.zeros((9, C_EXP), jnp.float32).at[:, :R_EXP].set(dense(ks[2], 9, (9, R_EXP))),
        "dw_s": dw_s, "dw_b": dw_b,
        "se_w1": jnp.zeros((C_EXP, R_SE), jnp.float32).at[:R_EXP].set(dense(ks[3], R_EXP, (R_EXP, R_SE))),
        "se_b1": jnp.zeros((R_SE,), jnp.float32),
        "se_w2": jnp.zeros((R_SE, C_EXP), jnp.float32).at[:, :R_EXP].set(dense(ks[4], R_SE, (R_SE, R_EXP))),
        "se_b2": jnp.zeros((C_EXP,), jnp.float32),
        "proj_w": pad2(dense(ks[5], R_EXP, (R_EXP, R_STEM)), (C_EXP, C_STEM)).astype(jnp.bfloat16),
        "proj_s": proj_s, "proj_b": proj_b,
        "head_w": pad2(dense(ks[6], R_STEM, (R_STEM, C_HEAD)), (C_STEM, C_HEAD)).astype(jnp.bfloat16),
        "head_s": head_s, "head_b": head_b,
        "fc_w": dense(ks[7], C_HEAD, (C_HEAD, N_CLS)),
        "fc_b": jnp.zeros((N_CLS,), jnp.float32),
    }
    return p


def face_model_forward(params, images, labels=None):
    """images: [N, 3, H, W] (NCHW). Returns logits [N, 7] or (logits, loss)."""
    p = params
    x = jnp.transpose(images, (0, 2, 3, 1)).astype(jnp.float32)    # -> NHWC

    # Stem: 3x3 conv stride 2, BN + SiLU fused into the matmul epilogue.
    patches, (N, Ho, Wo) = im2col_stem(x, K_STEM)
    HW = Ho * Wo
    y = matmul_bn_act(patches, p["stem_w"], p["stem_s"], p["stem_b"], act=True)  # [M, 128] bf16
    x_stem = y.reshape(N, HW, C_STEM)

    # MBConv expand 1x1 (BN+SiLU fused).
    h = matmul_bn_act(y, p["exp_w"], p["exp_s"], p["exp_b"], act=True)           # [M, 256] bf16
    h = h.reshape(N, HW, C_EXP)

    # Depthwise 3x3 + BN + SiLU + SE global-avg-pool, fused in one kernel.
    h, gap = dw3x3_bn_silu_gap(h, p["dw_w"], p["dw_s"], p["dw_b"], Ho, Wo)

    # Squeeze-and-excite MLP (tiny; plain JAX on purpose — padding it to MXU tiles wastes lanes).
    s1 = gap @ p["se_w1"] + p["se_b1"]
    s1 = s1 * jax.nn.sigmoid(s1)                                                 # SiLU
    gate = jax.nn.sigmoid(s1 @ p["se_w2"] + p["se_b2"])                          # [N, 256]

    # Projection 1x1 with fused SE gate, BN and residual add.
    x2 = proj_gate_residual(h, gate, p["proj_w"], p["proj_s"], p["proj_b"], x_stem)

    # Head 1x1 conv + BN + SiLU + global average pool, fused (no [M,1536] HBM round trip).
    feat = head_bn_silu_gap(x2, p["head_w"], p["head_s"], p["head_b"])           # [N, 1536] f32

    # Classifier (tiny; plain JAX).
    logits = feat @ p["fc_w"] + p["fc_b"]                                        # [N, 7]

    if labels is not None:
        onehot = jax.nn.one_hot(labels, N_CLS, dtype=jnp.float32)
        loss = cross_entropy_loss(logits, onehot)
        return logits, loss
    return logits


if __name__ == "__main__":
    key = jax.random.PRNGKey(0)
    k_img, k_lab, k_par = jax.random.split(key, 3)
    images = jax.random.normal(k_img, (2, 3, 32, 32), jnp.float32)   # NCHW
    labels = jax.random.randint(k_lab, (2,), 0, 7)
    params = init_params(k_par)

    logits = face_model_forward(params, images)                  # labels=None path
    logits2, loss = face_model_forward(params, images, labels)   # with loss
    jax.block_until_ready((logits, logits2, loss))

    assert logits.shape == (2, 7) and logits2.shape == (2, 7)
    assert bool(jnp.all(jnp.isfinite(logits)))
    assert loss.shape == () and bool(jnp.isfinite(loss))
    print("KERNEL_OK")
</pallas_src>

<mosaic_0001>
module attributes {stable_mosaic.version = 11 : i64} {
  func.func @_mm_bn_act_kernel(%arg0: i32, %arg1: i32, %arg2: memref<512x32xbf16, #tpu.memory_space<vmem>>, %arg3: memref<32x128xbf16, #tpu.memory_space<vmem>>, %arg4: memref<1x128xf32, #tpu.memory_space<vmem>>, %arg5: memref<1x128xf32, #tpu.memory_space<vmem>>, %arg6: memref<512x128xbf16, #tpu.memory_space<vmem>>) attributes {dimension_semantics = [#tpu.dimension_semantics<parallel>, #tpu.dimension_semantics<parallel>], iteration_bounds = array<i64: 1, 1>, scalar_prefetch = 0 : i64, scratch_operands = 0 : i64, tpu.core_type = #tpu.core_type<tc>, window_params = [{transform_indices = @transform_0, window_bounds = array<i64: 512, 32>}, {transform_indices = @transform_1, window_bounds = array<i64: 32, 128>}, {transform_indices = @transform_2, window_bounds = array<i64: 1, 128>}, {transform_indices = @transform_3, window_bounds = array<i64: 1, 128>}, {transform_indices = @transform_4, window_bounds = array<i64: 512, 128>}]} {
    %c0 = arith.constant 0 : index
    %c0_0 = arith.constant 0 : index
    %0 = vector.load %arg2[%c0, %c0_0] : memref<512x32xbf16, #tpu.memory_space<vmem>>, vector<512x32xbf16>
    %c0_1 = arith.constant 0 : index
    %c0_2 = arith.constant 0 : index
    %1 = vector.load %arg3[%c0_1, %c0_2] : memref<32x128xbf16, #tpu.memory_space<vmem>>, vector<32x128xbf16>
    %cst = arith.constant dense<0.000000e+00> : vector<512x128xf32>
    %2 = tpu.matmul %0, %1, %cst {dimension_numbers = #tpu.dot_dimension_numbers<[1], [0], [0], [1], [0, 0, 1, 1], [], []>} : vector<512x32xbf16>, vector<32x128xbf16>, vector<512x128xf32> -> vector<512x128xf32>
    %c0_3 = arith.constant 0 : index
    %c0_4 = arith.constant 0 : index
    %3 = vector.load %arg4[%c0_3, %c0_4] : memref<1x128xf32, #tpu.memory_space<vmem>>, vector<1x128xf32>
    %4 = vector.broadcast %3 : vector<1x128xf32> to vector<512x128xf32>
    %5 = arith.mulf %2, %4 : vector<512x128xf32>
    %c0_5 = arith.constant 0 : index
    %c0_6 = arith.constant 0 : index
    %6 = vector.load %arg5[%c0_5, %c0_6] : memref<1x128xf32, #tpu.memory_space<vmem>>, vector<1x128xf32>
    %7 = vector.broadcast %6 : vector<1x128xf32> to vector<512x128xf32>
    %8 = arith.addf %5, %7 : vector<512x128xf32>
    %cst_7 = arith.constant 0.000000e+00 : f32
    %9 = vector.broadcast %cst_7 : f32 to vector<512x128xf32>
    %10 = arith.subf %9, %8 : vector<512x128xf32>
    %11 = math.exp %10 : vector<512x128xf32>
    %cst_8 = arith.constant 1.000000e+00 : f32
    %12 = vector.broadcast %cst_8 : f32 to vector<512x128xf32>
    %13 = arith.addf %12, %11 : vector<512x128xf32>
    %14 = tpu.reciprocal %13 {approx = true} : vector<512x128xf32> -> vector<512x128xf32>
    %15 = arith.mulf %8, %14 : vector<512x128xf32>
    %16 = arith.truncf %15 : vector<512x128xf32> to vector<512x128xbf16>
    %c0_9 = arith.constant 0 : index
    %c0_10 = arith.constant 0 : index
    %17 = vector.load %arg6[%c0_9, %c0_10] : memref<512x128xbf16, #tpu.memory_space<vmem>>, vector<512x128xbf16>
    tpu.vector_store %arg6[%c0_9, %c0_10], %16 {strides = array<i32>} : memref<512x128xbf16, #tpu.memory_space<vmem>>, vector<512x128xbf16>,
    return
  }
  func.func @transform_0(%arg0: i32, %arg1: i32) -> (i32, i32) {
    %c0_i32 = arith.constant 0 : i32
    %c0_i32_0 = arith.constant 0 : i32
    return %arg0, %c0_i32 : i32, i32
  }
  func.func @transform_1(%arg0: i32, %arg1: i32) -> (i32, i32) {
    %c0_i32 = arith.constant 0 : i32
    %c0_i32_0 = arith.constant 0 : i32
    return %c0_i32, %arg1 : i32, i32
  }
  func.func @transform_2(%arg0: i32, %arg1: i32) -> (i32, i32) {
    %c0_i32 = arith.constant 0 : i32
    %c0_i32_0 = arith.constant 0 : i32
    return %c0_i32, %arg1 : i32, i32
  }
  func.func @transform_3(%arg0: i32, %arg1: i32) -> (i32, i32) {
    %c0_i32 = arith.constant 0 : i32
    %c0_i32_0 = arith.constant 0 : i32
    return %c0_i32, %arg1 : i32, i32
  }
  func.func @transform_4(%arg0: i32, %arg1: i32) -> (i32, i32) {
    %c0_i32 = arith.constant 0 : i32
    return %arg0, %arg1 : i32, i32
  }
}

</mosaic_0001>

<llo_original>
// kernel: tpu_custom_call.1
$region0: #{tpu_custom_call.1}
  #allocation0 [shape = 'u32[]', space=smem, size = 0x4, offset = 0x4, fixed_abs, tag = 'smem constant byte address 0x4 - core index']
  #allocation1 [shape = 'u32[144,128]{1,0:T(1,128)}', space=vmem, size = 0x12000, scoped, tag = 'internal scratch']
  %s0 = inlined_call_operand.vmem [shape: bf16[512,32], index: 0, kind: input, shape index: {}]
  %s1 = inlined_call_operand.vmem [shape: bf16[32,128], index: 1, kind: input, shape index: {}]
  %s2 = inlined_call_operand.vmem [shape: f32[1,128], index: 2, kind: input, shape index: {}]
  %s3 = inlined_call_operand.vmem [shape: f32[1,128], index: 3, kind: input, shape index: {}]
  %s4 = inlined_call_operand.hbm [shape: bf16[512,128], index: 4, kind: output, shape index: {}]
  %s5 = sld [smem:[#allocation0]]
  $region26: #{tpu_custom_call.1} parent=0
    _
  %s7 = ssub.s32 1, %s5
  %s8 = scalar_select 0, %s7, %s5
  $region1: #{tpu_custom_call.1} parent=0
    #allocation2 [shape = 'u8[131072]{0}', space=vmem, size = 0x20000, scoped, tag = 'output window, operand 0, single buffered']
    #allocation3 [shape = 's32[1]{0}', space=sflag, size = 0x4, scoped, tag = 'scoped memory for tpu_custom_call.1']
    %9 = vsyncpa [#allocation3], 0
    // Predicated region
    $region2: #{tpu_custom_call.1} parent=1 // pred_check
      _
    $region3: #{tpu_custom_call.1} parent=1 // pred_check_branch
      %11 = sbr.rel (0) target = $region5
    $region4: #{tpu_custom_call.1} parent=1 // pred_region
      _
    $region5: #{tpu_custom_call.1} parent=1 // pred_fallthru
      _
    // Predicated region
    $region6: #{tpu_custom_call.1} parent=1 // pred_check
      _
    $region7: #{tpu_custom_call.1} parent=1 // pred_check_branch
      %13 = sbr.rel (0) target = $region9
    $region8: #{tpu_custom_call.1} parent=1 // pred_region
      _
    $region9: #{tpu_custom_call.1} parent=1 // pred_fallthru
      _
    // Predicated region
    $region10: #{tpu_custom_call.1} parent=1 // pred_check
      _
    $region11: #{tpu_custom_call.1} parent=1 // pred_check_branch
      %15 = sbr.rel (0) target = $region13
    $region12: #{tpu_custom_call.1} parent=1 // pred_region
      _
    $region13: #{tpu_custom_call.1} parent=1 // pred_fallthru
      _
    // Predicated region
    $region14: #{tpu_custom_call.1} parent=1 // pred_check
      _
    $region15: #{tpu_custom_call.1} parent=1 // pred_check_branch
      %17 = sbr.rel (0) target = $region17
    $region16: #{tpu_custom_call.1} parent=1 // pred_region
      _
    $region17: #{tpu_custom_call.1} parent=1 // pred_fallthru
      _
    %v19 = vld [vmem:[%s0] sm:$0xf]
    %v20 = vld [vmem:[%s0 + $0x4] sm:$0xf]
    %v21 = vld [vmem:[%s0 + $0x8] sm:$0xf]
    %v22 = vld [vmem:[%s0 + $0xc] sm:$0xf]
    %v23 = vld [vmem:[%s0 + $0x10] sm:$0xf]
    %v24 = vld [vmem:[%s0 + $0x14] sm:$0xf]
    %v25 = vld [vmem:[%s0 + $0x18] sm:$0xf]
    %v26 = vld [vmem:[%s0 + $0x1c] sm:$0xf]
    %v27 = vld [vmem:[%s0 + $0x20] sm:$0xf]
    %v28 = vld [vmem:[%s0 + $0x24] sm:$0xf]
    %v29 = vld [vmem:[%s0 + $0x28] sm:$0xf]
    %v30 = vld [vmem:[%s0 + $0x2c] sm:$0xf]
    %v31 = vld [vmem:[%s0 + $0x30] sm:$0xf]
    %v32 = vld [vmem:[%s0 + $0x34] sm:$0xf]
    %v33 = vld [vmem:[%s0 + $0x38] sm:$0xf]
    %v34 = vld [vmem:[%s0 + $0x3c] sm:$0xf]
    %v35 = vld [vmem:[%s0 + $0x40] sm:$0xf]
    %v36 = vld [vmem:[%s0 + $0x44] sm:$0xf]
    %v37 = vld [vmem:[%s0 + $0x48] sm:$0xf]
    %v38 = vld [vmem:[%s0 + $0x4c] sm:$0xf]
    %v39 = vld [vmem:[%s0 + $0x50] sm:$0xf]
    %v40 = vld [vmem:[%s0 + $0x54] sm:$0xf]
    %v41 = vld [vmem:[%s0 + $0x58] sm:$0xf]
    %v42 = vld [vmem:[%s0 + $0x5c] sm:$0xf]
    %v43 = vld [vmem:[%s0 + $0x60] sm:$0xf]
    %v44 = vld [vmem:[%s0 + $0x64] sm:$0xf]
    %v45 = vld [vmem:[%s0 + $0x68] sm:$0xf]
    %v46 = vld [vmem:[%s0 + $0x6c] sm:$0xf]
    %v47 = vld [vmem:[%s0 + $0x70] sm:$0xf]
    %v48 = vld [vmem:[%s0 + $0x74] sm:$0xf]
    %v49 = vld [vmem:[%s0 + $0x78] sm:$0xf]
    %v50 = vld [vmem:[%s0 + $0x7c] sm:$0xf]
    %v51 = vld [vmem:[%s0 + $0x80] sm:$0xf]
    %v52 = vld [vmem:[%s0 + $0x84] sm:$0xf]
    %v53 = vld [vmem:[%s0 + $0x88] sm:$0xf]
    %v54 = vld [vmem:[%s0 + $0x8c] sm:$0xf]
    %v55 = vld [vmem:[%s0 + $0x90] sm:$0xf]
    %v56 = vld [vmem:[%s0 + $0x94] sm:$0xf]
    %v57 = vld [vmem:[%s0 + $0x98] sm:$0xf]
    %v58 = vld [vmem:[%s0 + $0x9c] sm:$0xf]
    %v59 = vld [vmem:[%s0 + $0xa0] sm:$0xf]
    %v60 = vld [vmem:[%s0 + $0xa4] sm:$0xf]
    %v61 = vld [vmem:[%s0 + $0xa8] sm:$0xf]
    %v62 = vld [vmem:[%s0 + $0xac] sm:$0xf]
    %v63 = vld [vmem:[%s0 + $0xb0] sm:$0xf]
    %v64 = vld [vmem:[%s0 + $0xb4] sm:$0xf]
    %v65 = vld [vmem:[%s0 + $0xb8] sm:$0xf]
    %v66 = vld [vmem:[%s0 + $0xbc] sm:$0xf]
    %v67 = vld [vmem:[%s0 + $0xc0] sm:$0xf]
    %v68 = vld [vmem:[%s0 + $0xc4] sm:$0xf]
    %v69 = vld [vmem:[%s0 + $0xc8] sm:$0xf]
    %v70 = vld [vmem:[%s0 + $0xcc] sm:$0xf]
    %v71 = vld [vmem:[%s0 + $0xd0] sm:$0xf]
    %v72 = vld [vmem:[%s0 + $0xd4] sm:$0xf]
    %v73 = vld [vmem:[%s0 + $0xd8] sm:$0xf]
    %v74 = vld [vmem:[%s0 + $0xdc] sm:$0xf]
    %v75 = vld [vmem:[%s0 + $0xe0] sm:$0xf]
    %v76 = vld [vmem:[%s0 + $0xe4] sm:$0xf]
    %v77 = vld [vmem:[%s0 + $0xe8] sm:$0xf]
    %v78 = vld [vmem:[%s0 + $0xec] sm:$0xf]
    %v79 = vld [vmem:[%s0 + $0xf0] sm:$0xf]
    %v80 = vld [vmem:[%s0 + $0xf4] sm:$0xf]
    %v81 = vld [vmem:[%s0 + $0xf8] sm:$0xf]
    %v82 = vld [vmem:[%s0 + $0xfc] sm:$0xf]
    %v83 = vld [vmem:[%s1] sm:$0xf]
    %v84 = vld [vmem:[%s1 + $0x4] sm:$0xf]
    %v85 = vld [vmem:[%s1 + $0x8] sm:$0xf]
    %v86 = vld [vmem:[%s1 + $0xc] sm:$0xf]
    %v151 = vunpack.c.l.b16 %v19
    %v152 = vunpack.c.l.b16 %v20
    %v153 = vunpack.c.l.b16 %v21
    %v154 = vunpack.c.l.b16 %v22
    %v155 = vunpack.c.l.b16 %v23
    %v156 = vunpack.c.l.b16 %v24
    %v157 = vunpack.c.l.b16 %v25
    %v158 = vunpack.c.l.b16 %v26
    %v159 = vunpack.c.l.b16 %v27
    %v160 = vunpack.c.l.b16 %v28
    %v161 = vunpack.c.l.b16 %v29
    %v162 = vunpack.c.l.b16 %v30
    %v163 = vunpack.c.l.b16 %v31
    %v164 = vunpack.c.l.b16 %v32
    %v165 = vunpack.c.l.b16 %v33
    %v166 = vunpack.c.l.b16 %v34
    %v167 = vunpack.c.l.b16 %v35
    %v168 = vunpack.c.l.b16 %v36
    %v169 = vunpack.c.l.b16 %v37
    %v170 = vunpack.c.l.b16 %v38
    %v171 = vunpack.c.l.b16 %v39
    %v172 = vunpack.c.l.b16 %v40
    %v173 = vunpack.c.l.b16 %v41
    %v174 = vunpack.c.l.b16 %v42
    %v175 = vunpack.c.l.b16 %v43
    %v176 = vunpack.c.l.b16 %v44
    %v177 = vunpack.c.l.b16 %v45
    %v178 = vunpack.c.l.b16 %v46
    %v179 = vunpack.c.l.b16 %v47
    %v180 = vunpack.c.l.b16 %v48
    %v181 = vunpack.c.l.b16 %v49
    %v182 = vunpack.c.l.b16 %v50
    %v183 = vunpack.c.l.b16 %v51
    %v184 = vunpack.c.l.b16 %v52
    %v185 = vunpack.c.l.b16 %v53
    %v186 = vunpack.c.l.b16 %v54
    %v187 = vunpack.c.l.b16 %v55
    %v188 = vunpack.c.l.b16 %v56
    %v189 = vunpack.c.l.b16 %v57
    %v190 = vunpack.c.l.b16 %v58
    %v191 = vunpack.c.l.b16 %v59
    %v192 = vunpack.c.l.b16 %v60
    %v193 = vunpack.c.l.b16 %v61
    %v194 = vunpack.c.l.b16 %v62
    %v195 = vunpack.c.l.b16 %v63
    %v196 = vunpack.c.l.b16 %v64
    %v197 = vunpack.c.l.b16 %v65
    %v198 = vunpack.c.l.b16 %v66
    %v199 = vunpack.c.l.b16 %v67
    %v200 = vunpack.c.l.b16 %v68
    %v201 = vunpack.c.l.b16 %v69
    %v202 = vunpack.c.l.b16 %v70
    %v203 = vunpack.c.l.b16 %v71
    %v204 = vunpack.c.l.b16 %v72
    %v205 = vunpack.c.l.b16 %v73
    %v206 = vunpack.c.l.b16 %v74
    %v207 = vunpack.c.l.b16 %v75
    %v208 = vunpack.c.l.b16 %v76
    %v209 = vunpack.c.l.b16 %v77
    %v210 = vunpack.c.l.b16 %v78
    %v211 = vunpack.c.l.b16 %v79
    %v212 = vunpack.c.l.b16 %v80
    %v213 = vunpack.c.l.b16 %v81
    %v214 = vunpack.c.l.b16 %v82
    %v215 = vpack.c.b16 %v152, %v151
    %v216 = vpack.c.b16 %v154, %v153
    %v217 = vpack.c.b16 %v156, %v155
    %v218 = vpack.c.b16 %v158, %v157
    %v219 = vpack.c.b16 %v160, %v159
    %v220 = vpack.c.b16 %v162, %v161
    %v221 = vpack.c.b16 %v164, %v163
    %v222 = vpack.c.b16 %v166, %v165
    %v223 = vpack.c.b16 %v168, %v167
    %v224 = vpack.c.b16 %v170, %v169
    %v225 = vpack.c.b16 %v172, %v171
    %v226 = vpack.c.b16 %v174, %v173
    %v227 = vpack.c.b16 %v176, %v175
    %v228 = vpack.c.b16 %v178, %v177
    %v229 = vpack.c.b16 %v180, %v179
    %v230 = vpack.c.b16 %v182, %v181
    %v231 = vpack.c.b16 %v184, %v183
    %v232 = vpack.c.b16 %v186, %v185
    %v233 = vpack.c.b16 %v188, %v187
    %v234 = vpack.c.b16 %v190, %v189
    %v235 = vpack.c.b16 %v192, %v191
    %v236 = vpack.c.b16 %v194, %v193
    %v237 = vpack.c.b16 %v196, %v195
    %v238 = vpack.c.b16 %v198, %v197
    %v239 = vpack.c.b16 %v200, %v199
    %v240 = vpack.c.b16 %v202, %v201
    %v241 = vpack.c.b16 %v204, %v203
    %v242 = vpack.c.b16 %v206, %v205
    %v243 = vpack.c.b16 %v208, %v207
    %v244 = vpack.c.b16 %v210, %v209
    %v245 = vpack.c.b16 %v212, %v211
    %v246 = vpack.c.b16 %v214, %v213
    %v251 = vunpack.c.l.b16 %v83
    %v252 = vunpack.c.l.b16 %v84
    %v253 = vunpack.c.l.b16 %v85
    %v254 = vunpack.c.l.b16 %v86
    %v255 = vpack.c.b16 %v252, %v251
    %v256 = vpack.c.b16 %v254, %v253
    %vm259 = vcmask 261120
    %v261 = vsel %vm259, %v215, 0
    %v264 = vsel %vm259, %v216, 0
    %v267 = vsel %vm259, %v217, 0
    %v270 = vsel %vm259, %v218, 0
    %v273 = vsel %vm259, %v219, 0
    %v276 = vsel %vm259, %v220, 0
    %v279 = vsel %vm259, %v221, 0
    %v282 = vsel %vm259, %v222, 0
    %v285 = vsel %vm259, %v223, 0
    %v288 = vsel %vm259, %v224, 0
    %v291 = vsel %vm259, %v225, 0
    %v294 = vsel %vm259, %v226, 0
    %v297 = vsel %vm259, %v227, 0
    %v300 = vsel %vm259, %v228, 0
    %v303 = vsel %vm259, %v229, 0
    %v306 = vsel %vm259, %v230, 0
    %v309 = vsel %vm259, %v231, 0
    %v312 = vsel %vm259, %v232, 0
    %v315 = vsel %vm259, %v233, 0
    %v318 = vsel %vm259, %v234, 0
    %v321 = vsel %vm259, %v235, 0
    %v324 = vsel %vm259, %v236, 0
    %v327 = vsel %vm259, %v237, 0
    %v330 = vsel %vm259, %v238, 0
    %v333 = vsel %vm259, %v239, 0
    %v336 = vsel %vm259, %v240, 0
    %v339 = vsel %vm259, %v241, 0
    %v342 = vsel %vm259, %v242, 0
    %v345 = vsel %vm259, %v243, 0
    %v348 = vsel %vm259, %v244, 0
    %v351 = vsel %vm259, %v245, 0
    %v354 = vsel %vm259, %v246, 0
    %356 = vmatprep.subr.bf16.mxu0 0
    %357 = vmatpush1.bf16.msra.mxu0 %v255
    %358 = vmatprep.subr.bf16.mxu0 0
    %359 = vmatpush1.bf16.msra.mxu0 %v256
    %360 = vmatprep.subr.bf16.mxu0 0
    %361 = vmatpush1.bf16.msra.mxu0 0
    %362 = vmatprep.subr.bf16.mxu0 0
    %363 = vmatpush1.bf16.msra.mxu0 0
    %364 = vmatprep.subr.bf16.mxu0 0
    %365 = vmatpush1.bf16.msra.mxu0 0
    %366 = vmatprep.subr.bf16.mxu0 0
    %367 = vmatpush1.bf16.msra.mxu0 0
    %368 = vmatprep.subr.bf16.mxu0 0
    %369 = vmatpush1.bf16.msra.mxu0 0
    %370 = vmatprep.subr.bf16.mxu0 0
    %371 = vmatpush1.bf16.msra.mxu0 0
    %372 = vmatprep.subr.bf16.mxu0 0
    %373 = vmatpush1.bf16.msra.mxu0 0
    %374 = vmatprep.subr.bf16.mxu0 0
    %375 = vmatpush1.bf16.msra.mxu0 0
    %376 = vmatprep.subr.bf16.mxu0 0
    %377 = vmatpush1.bf16.msra.mxu0 0
    %378 = vmatprep.subr.bf16.mxu0 0
    %379 = vmatpush1.bf16.msra.mxu0 0
    %380 = vmatprep.subr.bf16.mxu0 0
    %381 = vmatpush1.bf16.msra.mxu0 0
    %382 = vmatprep.subr.bf16.mxu0 0
    %383 = vmatpush1.bf16.msra.mxu0 0
    %384 = vmatprep.subr.bf16.mxu0 0
    %385 = vmatpush1.bf16.msra.mxu0 0
    %386 = vmatprep.subr.bf16.mxu0 0
    %387 = vmatpush1.bf16.msra.mxu0 0
    %388 = vmatprep.mubr.bf16.mxu0 0
    %389 = vmatmul.mubr.bf16.gmra.mrb[0].mxu0 %v261
    %v390 = vpop.f32.mrb[0].mxu0
    %v391 = vadd.f32 0.0, %v390
    %v392 = vpop.f32.mrb[0].mxu0
    %v393 = vpop.f32.mrb[0].mxu0
    %v394 = vadd.f32 0.0, %v393
    %v395 = vpop.f32.mrb[0].mxu0
    %396 = vmatprep.mubr.bf16.mxu0 0
    %397 = vmatmul.mubr.bf16.gmra.mrb[0].mxu0 %v264
    %v398 = vpop.f32.mrb[0].mxu0
    %v399 = vadd.f32 0.0, %v398
    %v400 = vpop.f32.mrb[0].mxu0
    %v401 = vpop.f32.mrb[0].mxu0
    %v402 = vadd.f32 0.0, %v401
    %v403 = vpop.f32.mrb[0].mxu0
    %404 = vmatprep.mubr.bf16.mxu0 0
    %405 = vmatmul.mubr.bf16.gmra.mrb[0].mxu0 %v267
    %v406 = vpop.f32.mrb[0].mxu0
    %v407 = vadd.f32 0.0, %v406
    %v408 = vpop.f32.mrb[0].mxu0
    %v409 = vpop.f32.mrb[0].mxu0
    %v410 = vadd.f32 0.0, %v409
    %v411 = vpop.f32.mrb[0].mxu0
    %412 = vmatprep.mubr.bf16.mxu0 0
    %413 = vmatmul.mubr.bf16.gmra.mrb[0].mxu0 %v270
    %v414 = vpop.f32.mrb[0].mxu0
    %v415 = vadd.f32 0.0, %v414
    %v416 = vpop.f32.mrb[0].mxu0
    %v417 = vpop.f32.mrb[0].mxu0
    %v418 = vadd.f32 0.0, %v417
    %v419 = vpop.f32.mrb[0].mxu0
    %420 = vmatprep.mubr.bf16.mxu0 0
    %421 = vmatmul.mubr.bf16.gmra.mrb[0].mxu0 %v273
    %v422 = vpop.f32.mrb[0].mxu0
    %v423 = vadd.f32 0.0, %v422
    %v424 = vpop.f32.mrb[0].mxu0
    %v425 = vpop.f32.mrb[0].mxu0
    %v426 = vadd.f32 0.0, %v425
    %v427 = vpop.f32.mrb[0].mxu0
    %428 = vmatprep.mubr.bf16.mxu0 0
    %429 = vmatmul.mubr.bf16.gmra.mrb[0].mxu0 %v276
    %v430 = vpop.f32.mrb[0].mxu0
    %v431 = vadd.f32 0.0, %v430
    %v432 = vpop.f32.mrb[0].mxu0
    %v433 = vpop.f32.mrb[0].mxu0
    %v434 = vadd.f32 0.0, %v433
    %v435 = vpop.f32.mrb[0].mxu0
    %436 = vmatprep.mubr.bf16.mxu0 0
    %437 = vmatmul.mubr.bf16.gmra.mrb[0].mxu0 %v279
    %v438 = vpop.f32.mrb[0].mxu0
    %v439 = vadd.f32 0.0, %v438
    %v440 = vpop.f32.mrb[0].mxu0
    %v441 = vpop.f32.mrb[0].mxu0
    %v442 = vadd.f32 0.0, %v441
    %v443 = vpop.f32.mrb[0].mxu0
    %444 = vmatprep.mubr.bf16.mxu0 0
    %445 = vmatmul.mubr.bf16.gmra.mrb[0].mxu0 %v282
    %v446 = vpop.f32.mrb[0].mxu0
    %v447 = vadd.f32 0.0, %v446
    %v448 = vpop.f32.mrb[0].mxu0
    %v449 = vpop.f32.mrb[0].mxu0
    %v450 = vadd.f32 0.0, %v449
    %v451 = vpop.f32.mrb[0].mxu0
    %452 = vmatprep.mubr.bf16.mxu0 0
    %453 = vmatmul.mubr.bf16.gmra.mrb[0].mxu0 %v285
    %v454 = vpop.f32.mrb[0].mxu0
    %v455 = vadd.f32 0.0, %v454
    %v456 = vpop.f32.mrb[0].mxu0
    %v457 = vpop.f32.mrb[0].mxu0
    %v458 = vadd.f32 0.0, %v457
    %v459 = vpop.f32.mrb[0].mxu0
    %460 = vmatprep.mubr.bf16.mxu0 0
    %461 = vmatmul.mubr.bf16.gmra.mrb[0].mxu0 %v288
    %v462 = vpop.f32.mrb[0].mxu0
    %v463 = vadd.f32 0.0, %v462
    %v464 = vpop.f32.mrb[0].mxu0
    %v465 = vpop.f32.mrb[0].mxu0
    %v466 = vadd.f32 0.0, %v465
    %v467 = vpop.f32.mrb[0].mxu0
    %468 = vmatprep.mubr.bf16.mxu0 0
    %469 = vmatmul.mubr.bf16.gmra.mrb[0].mxu0 %v291
    %v470 = vpop.f32.mrb[0].mxu0
    %v471 = vadd.f32 0.0, %v470
    %v472 = vpop.f32.mrb[0].mxu0
    %v473 = vpop.f32.mrb[0].mxu0
    %v474 = vadd.f32 0.0, %v473
    %v475 = vpop.f32.mrb[0].mxu0
    %476 = vmatprep.mubr.bf16.mxu0 0
    %477 = vmatmul.mubr.bf16.gmra.mrb[0].mxu0 %v294
    %v478 = vpop.f32.mrb[0].mxu0
    %v479 = vadd.f32 0.0, %v478
    %v480 = vpop.f32.mrb[0].mxu0
    %v481 = vpop.f32.mrb[0].mxu0
    %v482 = vadd.f32 0.0, %v481
    %v483 = vpop.f32.mrb[0].mxu0
    %484 = vmatprep.mubr.bf16.mxu0 0
    %485 = vmatmul.mubr.bf16.gmra.mrb[0].mxu0 %v297
    %v486 = vpop.f32.mrb[0].mxu0
    %v487 = vadd.f32 0.0, %v486
    %v488 = vpop.f32.mrb[0].mxu0
    %v489 = vpop.f32.mrb[0].mxu0
    %v490 = vadd.f32 0.0, %v489
    %v491 = vpop.f32.mrb[0].mxu0
    %492 = vmatprep.mubr.bf16.mxu0 0
    %493 = vmatmul.mubr.bf16.gmra.mrb[0].mxu0 %v300
    %v494 = vpop.f32.mrb[0].mxu0
    %v495 = vadd.f32 0.0, %v494
    %v496 = vpop.f32.mrb[0].mxu0
    %v497 = vpop.f32.mrb[0].mxu0
    %v498 = vadd.f32 0.0, %v497
    %v499 = vpop.f32.mrb[0].mxu0
    %500 = vmatprep.mubr.bf16.mxu0 0
    %501 = vmatmul.mubr.bf16.gmra.mrb[0].mxu0 %v303
    %v502 = vpop.f32.mrb[0].mxu0
    %v503 = vadd.f32 0.0, %v502
    %v504 = vpop.f32.mrb[0].mxu0
    %v505 = vpop.f32.mrb[0].mxu0
    %v506 = vadd.f32 0.0, %v505
    %v507 = vpop.f32.mrb[0].mxu0
    %508 = vmatprep.mubr.bf16.mxu0 0
    %509 = vmatmul.mubr.bf16.gmra.mrb[0].mxu0 %v306
    %v510 = vpop.f32.mrb[0].mxu0
    %v511 = vadd.f32 0.0, %v510
    %v512 = vpop.f32.mrb[0].mxu0
    %v513 = vpop.f32.mrb[0].mxu0
    %v514 = vadd.f32 0.0, %v513
    %v515 = vpop.f32.mrb[0].mxu0
    %516 = vmatprep.mubr.bf16.mxu0 0
    %517 = vmatmul.mubr.bf16.gmra.mrb[0].mxu0 %v309
    %v518 = vpop.f32.mrb[0].mxu0
    %v519 = vadd.f32 0.0, %v518
    %v520 = vpop.f32.mrb[0].mxu0
    %v521 = vpop.f32.mrb[0].mxu0
    %v522 = vadd.f32 0.0, %v521
    %v523 = vpop.f32.mrb[0].mxu0
    %524 = vmatprep.mubr.bf16.mxu0 0
    %525 = vmatmul.mubr.bf16.gmra.mrb[0].mxu0 %v312
    %v526 = vpop.f32.mrb[0].mxu0
    %v527 = vadd.f32 0.0, %v526
    %v528 = vpop.f32.mrb[0].mxu0
    %v529 = vpop.f32.mrb[0].mxu0
    %v530 = vadd.f32 0.0, %v529
    %v531 = vpop.f32.mrb[0].mxu0
    %532 = vmatprep.mubr.bf16.mxu0 0
    %533 = vmatmul.mubr.bf16.gmra.mrb[0].mxu0 %v315
    %v534 = vpop.f32.mrb[0].mxu0
    %v535 = vadd.f32 0.0, %v534
    %v536 = vpop.f32.mrb[0].mxu0
    %v537 = vpop.f32.mrb[0].mxu0
    %v538 = vadd.f32 0.0, %v537
    %v539 = vpop.f32.mrb[0].mxu0
    %540 = vmatprep.mubr.bf16.mxu0 0
    %541 = vmatmul.mubr.bf16.gmra.mrb[0].mxu0 %v318
    %v542 = vpop.f32.mrb[0].mxu0
    %v543 = vadd.f32 0.0, %v542
    %v544 = vpop.f32.mrb[0].mxu0
    %v545 = vpop.f32.mrb[0].mxu0
    %v546 = vadd.f32 0.0, %v545
    %v547 = vpop.f32.mrb[0].mxu0
    %548 = vmatprep.mubr.bf16.mxu0 0
    %549 = vmatmul.mubr.bf16.gmra.mrb[0].mxu0 %v321
    %v550 = vpop.f32.mrb[0].mxu0
    %v551 = vadd.f32 0.0, %v550
    %v552 = vpop.f32.mrb[0].mxu0
    %v553 = vpop.f32.mrb[0].mxu0
    %v554 = vadd.f32 0.0, %v553
    %v555 = vpop.f32.mrb[0].mxu0
    %556 = vmatprep.mubr.bf16.mxu0 0
    %557 = vmatmul.mubr.bf16.gmra.mrb[0].mxu0 %v324
    %v558 = vpop.f32.mrb[0].mxu0
    %v559 = vadd.f32 0.0, %v558
    %v560 = vpop.f32.mrb[0].mxu0
    %v561 = vpop.f32.mrb[0].mxu0
    %v562 = vadd.f32 0.0, %v561
    %v563 = vpop.f32.mrb[0].mxu0
    %564 = vmatprep.mubr.bf16.mxu0 0
    %565 = vmatmul.mubr.bf16.gmra.mrb[0].mxu0 %v327
    %v566 = vpop.f32.mrb[0].mxu0
    %v567 = vadd.f32 0.0, %v566
    %v568 = vpop.f32.mrb[0].mxu0
    %v569 = vpop.f32.mrb[0].mxu0
    %v570 = vadd.f32 0.0, %v569
    %v571 = vpop.f32.mrb[0].mxu0
    %572 = vmatprep.mubr.bf16.mxu0 0
    %573 = vmatmul.mubr.bf16.gmra.mrb[0].mxu0 %v330
    %v574 = vpop.f32.mrb[0].mxu0
    %v575 = vadd.f32 0.0, %v574
    %v576 = vpop.f32.mrb[0].mxu0
    %v577 = vpop.f32.mrb[0].mxu0
    %v578 = vadd.f32 0.0, %v577
    %v579 = vpop.f32.mrb[0].mxu0
    %580 = vmatprep.mubr.bf16.mxu0 0
    %581 = vmatmul.mubr.bf16.gmra.mrb[0].mxu0 %v333
    %v582 = vpop.f32.mrb[0].mxu0
    %v583 = vadd.f32 0.0, %v582
    %v584 = vpop.f32.mrb[0].mxu0
    %v585 = vpop.f32.mrb[0].mxu0
    %v586 = vadd.f32 0.0, %v585
    %v587 = vpop.f32.mrb[0].mxu0
    %588 = vmatprep.mubr.bf16.mxu0 0
    %589 = vmatmul.mubr.bf16.gmra.mrb[0].mxu0 %v336
    %v590 = vpop.f32.mrb[0].mxu0
    %v591 = vadd.f32 0.0, %v590
    %v592 = vpop.f32.mrb[0].mxu0
    %v593 = vpop.f32.mrb[0].mxu0
    %v594 = vadd.f32 0.0, %v593
    %v595 = vpop.f32.mrb[0].mxu0
    %596 = vmatprep.mubr.bf16.mxu0 0
    %597 = vmatmul.mubr.bf16.gmra.mrb[0].mxu0 %v339
    %v598 = vpop.f32.mrb[0].mxu0
    %v599 = vadd.f32 0.0, %v598
    %v600 = vpop.f32.mrb[0].mxu0
    %v601 = vpop.f32.mrb[0].mxu0
    %v602 = vadd.f32 0.0, %v601
    %v603 = vpop.f32.mrb[0].mxu0
    %604 = vmatprep.mubr.bf16.mxu0 0
    %605 = vmatmul.mubr.bf16.gmra.mrb[0].mxu0 %v342
    %v606 = vpop.f32.mrb[0].mxu0
    %v607 = vadd.f32 0.0, %v606
    %v608 = vpop.f32.mrb[0].mxu0
    %v609 = vpop.f32.mrb[0].mxu0
    %v610 = vadd.f32 0.0, %v609
    %v611 = vpop.f32.mrb[0].mxu0
    %612 = vmatprep.mubr.bf16.mxu0 0
    %613 = vmatmul.mubr.bf16.gmra.mrb[0].mxu0 %v345
    %v614 = vpop.f32.mrb[0].mxu0
    %v615 = vadd.f32 0.0, %v614
    %v616 = vpop.f32.mrb[0].mxu0
    %v617 = vpop.f32.mrb[0].mxu0
    %v618 = vadd.f32 0.0, %v617
    %v619 = vpop.f32.mrb[0].mxu0
    %620 = vmatprep.mubr.bf16.mxu0 0
    %621 = vmatmul.mubr.bf16.gmra.mrb[0].mxu0 %v348
    %v622 = vpop.f32.mrb[0].mxu0
    %v623 = vadd.f32 0.0, %v622
    %v624 = vpop.f32.mrb[0].mxu0
    %v625 = vpop.f32.mrb[0].mxu0
    %v626 = vadd.f32 0.0, %v625
    %v627 = vpop.f32.mrb[0].mxu0
    %628 = vmatprep.mubr.bf16.mxu0 0
    %629 = vmatmul.mubr.bf16.gmra.mrb[0].mxu0 %v351
    %v630 = vpop.f32.mrb[0].mxu0
    %v631 = vadd.f32 0.0, %v630
    %v632 = vpop.f32.mrb[0].mxu0
    %v633 = vpop.f32.mrb[0].mxu0
    %v634 = vadd.f32 0.0, %v633
    %v635 = vpop.f32.mrb[0].mxu0
    %636 = vmatprep.mubr.bf16.mxu0 0
    %637 = vmatmul.mubr.bf16.gmra.mrb[0].mxu0 %v354
    %v638 = vpop.f32.mrb[0].mxu0
    %v639 = vadd.f32 0.0, %v638
    %v640 = vpop.f32.mrb[0].mxu0
    %v641 = vpop.f32.mrb[0].mxu0
    %v642 = vadd.f32 0.0, %v641
    %v643 = vpop.f32.mrb[0].mxu0
    %644 = vdwg.mxu0
    %v645 = vld [vmem:[%s2] sm:$0x1]
    %v647 = vlaneseq
    %v648 = vshrl.u32 %v647, 7
    %v649 = vsub.s32 0, %v648
    %v650 = vrot.slane %v645, %v649
    %v652 = vmul.f32 %v391, %v650
    %v653 = vmul.f32 %v394, %v650
    %v654 = vmul.f32 %v399, %v650
    %v655 = vmul.f32 %v402, %v650
    %v656 = vmul.f32 %v407, %v650
    %v657 = vmul.f32 %v410, %v650
    %v658 = vmul.f32 %v415, %v650
    %v659 = vmul.f32 %v418, %v650
    %v660 = vmul.f32 %v423, %v650
    %v661 = vmul.f32 %v426, %v650
    %v662 = vmul.f32 %v431, %v650
    %v663 = vmul.f32 %v434, %v650
    %v664 = vmul.f32 %v439, %v650
    %v665 = vmul.f32 %v442, %v650
    %v666 = vmul.f32 %v447, %v650
    %v667 = vmul.f32 %v450, %v650
    %v668 = vmul.f32 %v455, %v650
    %v669 = vmul.f32 %v458, %v650
    %v670 = vmul.f32 %v463, %v650
    %v671 = vmul.f32 %v466, %v650
    %v672 = vmul.f32 %v471, %v650
    %v673 = vmul.f32 %v474, %v650
    %v674 = vmul.f32 %v479, %v650
    %v675 = vmul.f32 %v482, %v650
    %v676 = vmul.f32 %v487, %v650
    %v677 = vmul.f32 %v490, %v650
    %v678 = vmul.f32 %v495, %v650
    %v679 = vmul.f32 %v498, %v650
    %v680 = vmul.f32 %v503, %v650
    %v681 = vmul.f32 %v506, %v650
    %v682 = vmul.f32 %v511, %v650
    %v683 = vmul.f32 %v514, %v650
    %v684 = vmul.f32 %v519, %v650
    %v685 = vmul.f32 %v522, %v650
    %v686 = vmul.f32 %v527, %v650
    %v687 = vmul.f32 %v530, %v650
    %v688 = vmul.f32 %v535, %v650
    %v689 = vmul.f32 %v538, %v650
    %v690 = vmul.f32 %v543, %v650
    %v691 = vmul.f32 %v546, %v650
    %v692 = vmul.f32 %v551, %v650
    %v693 = vmul.f32 %v554, %v650
    %v694 = vmul.f32 %v559, %v650
    %v695 = vmul.f32 %v562, %v650
    %v696 = vmul.f32 %v567, %v650
    %v697 = vmul.f32 %v570, %v650
    %v698 = vmul.f32 %v575, %v650
    %v699 = vmul.f32 %v578, %v650
    %v700 = vmul.f32 %v583, %v650
    %v701 = vmul.f32 %v586, %v650
    %v702 = vmul.f32 %v591, %v650
    %v703 = vmul.f32 %v594, %v650
    %v704 = vmul.f32 %v599, %v650
    %v705 = vmul.f32 %v602, %v650
    %v706 = vmul.f32 %v607, %v650
    %v707 = vmul.f32 %v610, %v650
    %v708 = vmul.f32 %v615, %v650
    %v709 = vmul.f32 %v618, %v650
    %v710 = vmul.f32 %v623, %v650
    %v711 = vmul.f32 %v626, %v650
    %v712 = vmul.f32 %v631, %v650
    %v713 = vmul.f32 %v634, %v650
    %v714 = vmul.f32 %v639, %v650
    %v715 = vmul.f32 %v642, %v650
    %v716 = vld [vmem:[%s3] sm:$0x1]
    %v718 = vlaneseq
    %v719 = vshrl.u32 %v718, 7
    %v720 = vsub.s32 0, %v719
    %v721 = vrot.slane %v716, %v720
    %v723 = vadd.f32 %v652, %v721
    %v724 = vadd.f32 %v653, %v721
    %v725 = vadd.f32 %v654, %v721
    %v726 = vadd.f32 %v655, %v721
    %v727 = vadd.f32 %v656, %v721
    %v728 = vadd.f32 %v657, %v721
    %v729 = vadd.f32 %v658, %v721
    %v730 = vadd.f32 %v659, %v721
    %v731 = vadd.f32 %v660, %v721
    %v732 = vadd.f32 %v661, %v721
    %v733 = vadd.f32 %v662, %v721
    %v734 = vadd.f32 %v663, %v721
    %v735 = vadd.f32 %v664, %v721
    %v736 = vadd.f32 %v665, %v721
    %v737 = vadd.f32 %v666, %v721
    %v738 = vadd.f32 %v667, %v721
    %v739 = vadd.f32 %v668, %v721
    %v740 = vadd.f32 %v669, %v721
    %v741 = vadd.f32 %v670, %v721
    %v742 = vadd.f32 %v671, %v721
    %v743 = vadd.f32 %v672, %v721
    %v744 = vadd.f32 %v673, %v721
    %v745 = vadd.f32 %v674, %v721
    %v746 = vadd.f32 %v675, %v721
    %v747 = vadd.f32 %v676, %v721
    %v748 = vadd.f32 %v677, %v721
    %v749 = vadd.f32 %v678, %v721
    %v750 = vadd.f32 %v679, %v721
    %v751 = vadd.f32 %v680, %v721
    %v752 = vadd.f32 %v681, %v721
    %v753 = vadd.f32 %v682, %v721
    %v754 = vadd.f32 %v683, %v721
    %v755 = vadd.f32 %v684, %v721
    %v756 = vadd.f32 %v685, %v721
    %v757 = vadd.f32 %v686, %v721
    %v758 = vadd.f32 %v687, %v721
    %v759 = vadd.f32 %v688, %v721
    %v760 = vadd.f32 %v689, %v721
    %v761 = vadd.f32 %v690, %v721
    %v762 = vadd.f32 %v691, %v721
    %v763 = vadd.f32 %v692, %v721
    %v764 = vadd.f32 %v693, %v721
    %v765 = vadd.f32 %v694, %v721
    %v766 = vadd.f32 %v695, %v721
    %v767 = vadd.f32 %v696, %v721
    %v768 = vadd.f32 %v697, %v721
    %v769 = vadd.f32 %v698, %v721
    %v770 = vadd.f32 %v699, %v721
    %v771 = vadd.f32 %v700, %v721
    %v772 = vadd.f32 %v701, %v721
    %v773 = vadd.f32 %v702, %v721
    %v774 = vadd.f32 %v703, %v721
    %v775 = vadd.f32 %v704, %v721
    %v776 = vadd.f32 %v705, %v721
    %v777 = vadd.f32 %v706, %v721
    %v778 = vadd.f32 %v707, %v721
    %v779 = vadd.f32 %v708, %v721
    %v780 = vadd.f32 %v709, %v721
    %v781 = vadd.f32 %v710, %v721
    %v782 = vadd.f32 %v711, %v721
    %v783 = vadd.f32 %v712, %v721
    %v784 = vadd.f32 %v713, %v721
    %v785 = vadd.f32 %v714, %v721
    %v786 = vadd.f32 %v715, %v721
    %v787 = vsub.f32 0.0, %v723
    %v788 = vsub.f32 0.0, %v724
    %v789 = vsub.f32 0.0, %v725
    %v790 = vsub.f32 0.0, %v726
    %v791 = vsub.f32 0.0, %v727
    %v792 = vsub.f32 0.0, %v728
    %v793 = vsub.f32 0.0, %v729
    %v794 = vsub.f32 0.0, %v730
    %v795 = vsub.f32 0.0, %v731
    %v796 = vsub.f32 0.0, %v732
    %v797 = vsub.f32 0.0, %v733
    %v798 = vsub.f32 0.0, %v734
    %v799 = vsub.f32 0.0, %v735
    %v800 = vsub.f32 0.0, %v736
    %v801 = vsub.f32 0.0, %v737
    %v802 = vsub.f32 0.0, %v738
    %v803 = vsub.f32 0.0, %v739
    %v804 = vsub.f32 0.0, %v740
    %v805 = vsub.f32 0.0, %v741
    %v806 = vsub.f32 0.0, %v742
    %v807 = vsub.f32 0.0, %v743
    %v808 = vsub.f32 0.0, %v744
    %v809 = vsub.f32 0.0, %v745
    %v810 = vsub.f32 0.0, %v746
    %v811 = vsub.f32 0.0, %v747
    %v812 = vsub.f32 0.0, %v748
    %v813 = vsub.f32 0.0, %v749
    %v814 = vsub.f32 0.0, %v750
    %v815 = vsub.f32 0.0, %v751
    %v816 = vsub.f32 0.0, %v752
    %v817 = vsub.f32 0.0, %v753
    %v818 = vsub.f32 0.0, %v754
    %v819 = vsub.f32 0.0, %v755
    %v820 = vsub.f32 0.0, %v756
    %v821 = vsub.f32 0.0, %v757
    %v822 = vsub.f32 0.0, %v758
    %v823 = vsub.f32 0.0, %v759
    %v824 = vsub.f32 0.0, %v760
    %v825 = vsub.f32 0.0, %v761
    %v826 = vsub.f32 0.0, %v762
    %v827 = vsub.f32 0.0, %v763
    %v828 = vsub.f32 0.0, %v764
    %v829 = vsub.f32 0.0, %v765
    %v830 = vsub.f32 0.0, %v766
    %v831 = vsub.f32 0.0, %v767
    %v832 = vsub.f32 0.0, %v768
    %v833 = vsub.f32 0.0, %v769
    %v834 = vsub.f32 0.0, %v770
    %v835 = vsub.f32 0.0, %v771
    %v836 = vsub.f32 0.0, %v772
    %v837 = vsub.f32 0.0, %v773
    %v838 = vsub.f32 0.0, %v774
    %v839 = vsub.f32 0.0, %v775
    %v840 = vsub.f32 0.0, %v776
    %v841 = vsub.f32 0.0, %v777
    %v842 = vsub.f32 0.0, %v778
    %v843 = vsub.f32 0.0, %v779
    %v844 = vsub.f32 0.0, %v780
    %v845 = vsub.f32 0.0, %v781
    %v846 = vsub.f32 0.0, %v782
    %v847 = vsub.f32 0.0, %v783
    %v848 = vsub.f32 0.0, %v784
    %v849 = vsub.f32 0.0, %v785
    %v850 = vsub.f32 0.0, %v786
    %v851 = vmul.f32 %v787, 1.442695
    %v852 = vpow.pop %v851
    %v853 = vmul.f32 %v788, 1.442695
    %v854 = vpow.pop %v853
    %v855 = vmul.f32 %v789, 1.442695
    %v856 = vpow.pop %v855
    %v857 = vmul.f32 %v790, 1.442695
    %v858 = vpow.pop %v857
    %v859 = vmul.f32 %v791, 1.442695
    %v860 = vpow.pop %v859
    %v861 = vmul.f32 %v792, 1.442695
    %v862 = vpow.pop %v861
    %v863 = vmul.f32 %v793, 1.442695
    %v864 = vpow.pop %v863
    %v865 = vmul.f32 %v794, 1.442695
    %v866 = vpow.pop %v865
    %v867 = vmul.f32 %v795, 1.442695
    %v868 = vpow.pop %v867
    %v869 = vmul.f32 %v796, 1.442695
    %v870 = vpow.pop %v869
    %v871 = vmul.f32 %v797, 1.442695
    %v872 = vpow.pop %v871
    %v873 = vmul.f32 %v798, 1.442695
    %v874 = vpow.pop %v873
    %v875 = vmul.f32 %v799, 1.442695
    %v876 = vpow.pop %v875
    %v877 = vmul.f32 %v800, 1.442695
    %v878 = vpow.pop %v877
    %v879 = vmul.f32 %v801, 1.442695
    %v880 = vpow.pop %v879
    %v881 = vmul.f32 %v802, 1.442695
    %v882 = vpow.pop %v881
    %v883 = vmul.f32 %v803, 1.442695
    %v884 = vpow.pop %v883
    %v885 = vmul.f32 %v804, 1.442695
    %v886 = vpow.pop %v885
    %v887 = vmul.f32 %v805, 1.442695
    %v888 = vpow.pop %v887
    %v889 = vmul.f32 %v806, 1.442695
    %v890 = vpow.pop %v889
    %v891 = vmul.f32 %v807, 1.442695
    %v892 = vpow.pop %v891
    %v893 = vmul.f32 %v808, 1.442695
    %v894 = vpow.pop %v893
    %v895 = vmul.f32 %v809, 1.442695
    %v896 = vpow.pop %v895
    %v897 = vmul.f32 %v810, 1.442695
    %v898 = vpow.pop %v897
    %v899 = vmul.f32 %v811, 1.442695
    %v900 = vpow.pop %v899
    %v901 = vmul.f32 %v812, 1.442695
    %v902 = vpow.pop %v901
    %v903 = vmul.f32 %v813, 1.442695
    %v904 = vpow.pop %v903
    %v905 = vmul.f32 %v814, 1.442695
    %v906 = vpow.pop %v905
    %v907 = vmul.f32 %v815, 1.442695
    %v908 = vpow.pop %v907
    %v909 = vmul.f32 %v816, 1.442695
    %v910 = vpow.pop %v909
    %v911 = vmul.f32 %v817, 1.442695
    %v912 = vpow.pop %v911
    %v913 = vmul.f32 %v818, 1.442695
    %v914 = vpow.pop %v913
    %v915 = vmul.f32 %v819, 1.442695
    %v916 = vpow.pop %v915
    %v917 = vmul.f32 %v820, 1.442695
    %v918 = vpow.pop %v917
    %v919 = vmul.f32 %v821, 1.442695
    %v920 = vpow.pop %v919
    %v921 = vmul.f32 %v822, 1.442695
    %v922 = vpow.pop %v921
    %v923 = vmul.f32 %v823, 1.442695
    %v924 = vpow.pop %v923
    %v925 = vmul.f32 %v824, 1.442695
    %v926 = vpow.pop %v925
    %v927 = vmul.f32 %v825, 1.442695
    %v928 = vpow.pop %v927
    %v929 = vmul.f32 %v826, 1.442695
    %v930 = vpow.pop %v929
    %v931 = vmul.f32 %v827, 1.442695
    %v932 = vpow.pop %v931
    %v933 = vmul.f32 %v828, 1.442695
    %v934 = vpow.pop %v933
    %v935 = vmul.f32 %v829, 1.442695
    %v936 = vpow.pop %v935
    %v937 = vmul.f32 %v830, 1.442695
    %v938 = vpow.pop %v937
    %v939 = vmul.f32 %v831, 1.442695
    %v940 = vpow.pop %v939
    %v941 = vmul.f32 %v832, 1.442695
    %v942 = vpow.pop %v941
    %v943 = vmul.f32 %v833, 1.442695
    %v944 = vpow.pop %v943
    %v945 = vmul.f32 %v834, 1.442695
    %v946 = vpow.pop %v945
    %v947 = vmul.f32 %v835, 1.442695
    %v948 = vpow.pop %v947
    %v949 = vmul.f32 %v836, 1.442695
    %v950 = vpow.pop %v949
    %v951 = vmul.f32 %v837, 1.442695
    %v952 = vpow.pop %v951
    %v953 = vmul.f32 %v838, 1.442695
    %v954 = vpow.pop %v953
    %v955 = vmul.f32 %v839, 1.442695
    %v956 = vpow.pop %v955
    %v957 = vmul.f32 %v840, 1.442695
    %v958 = vpow.pop %v957
    %v959 = vmul.f32 %v841, 1.442695
    %v960 = vpow.pop %v959
    %v961 = vmul.f32 %v842, 1.442695
    %v962 = vpow.pop %v961
    %v963 = vmul.f32 %v843, 1.442695
    %v964 = vpow.pop %v963
    %v965 = vmul.f32 %v844, 1.442695
    %v966 = vpow.pop %v965
    %v967 = vmul.f32 %v845, 1.442695
    %v968 = vpow.pop %v967
    %v969 = vmul.f32 %v846, 1.442695
    %v970 = vpow.pop %v969
    %v971 = vmul.f32 %v847, 1.442695
    %v972 = vpow.pop %v971
    %v973 = vmul.f32 %v848, 1.442695
    %v974 = vpow.pop %v973
    %v975 = vmul.f32 %v849, 1.442695
    %v976 = vpow.pop %v975
    %v977 = vmul.f32 %v850, 1.442695
    %v978 = vpow.pop %v977
    %v979 = vadd.f32 %v852, 1.0
    %v980 = vadd.f32 %v854, 1.0
    %v981 = vadd.f32 %v856, 1.0
    %v982 = vadd.f32 %v858, 1.0
    %v983 = vadd.f32 %v860, 1.0
    %v984 = vadd.f32 %v862, 1.0
    %v985 = vadd.f32 %v864, 1.0
    %v986 = vadd.f32 %v866, 1.0
    %v987 = vadd.f32 %v868, 1.0
    %v988 = vadd.f32 %v870, 1.0
    %v989 = vadd.f32 %v872, 1.0
    %v990 = vadd.f32 %v874, 1.0
    %v991 = vadd.f32 %v876, 1.0
    %v992 = vadd.f32 %v878, 1.0
    %v993 = vadd.f32 %v880, 1.0
    %v994 = vadd.f32 %v882, 1.0
    %v995 = vadd.f32 %v884, 1.0
    %v996 = vadd.f32 %v886, 1.0
    %v997 = vadd.f32 %v888, 1.0
    %v998 = vadd.f32 %v890, 1.0
    %v999 = vadd.f32 %v892, 1.0
    %v1000 = vadd.f32 %v894, 1.0
    %v1001 = vadd.f32 %v896, 1.0
    %v1002 = vadd.f32 %v898, 1.0
    %v1003 = vadd.f32 %v900, 1.0
    %v1004 = vadd.f32 %v902, 1.0
    %v1005 = vadd.f32 %v904, 1.0
    %v1006 = vadd.f32 %v906, 1.0
    %v1007 = vadd.f32 %v908, 1.0
    %v1008 = vadd.f32 %v910, 1.0
    %v1009 = vadd.f32 %v912, 1.0
    %v1010 = vadd.f32 %v914, 1.0
    %v1011 = vadd.f32 %v916, 1.0
    %v1012 = vadd.f32 %v918, 1.0
    %v1013 = vadd.f32 %v920, 1.0
    %v1014 = vadd.f32 %v922, 1.0
    %v1015 = vadd.f32 %v924, 1.0
    %v1016 = vadd.f32 %v926, 1.0
    %v1017 = vadd.f32 %v928, 1.0
    %v1018 = vadd.f32 %v930, 1.0
    %v1019 = vadd.f32 %v932, 1.0
    %v1020 = vadd.f32 %v934, 1.0
    %v1021 = vadd.f32 %v936, 1.0
    %v1022 = vadd.f32 %v938, 1.0
    %v1023 = vadd.f32 %v940, 1.0
    %v1024 = vadd.f32 %v942, 1.0
    %v1025 = vadd.f32 %v944, 1.0
    %v1026 = vadd.f32 %v946, 1.0
    %v1027 = vadd.f32 %v948, 1.0
    %v1028 = vadd.f32 %v950, 1.0
    %v1029 = vadd.f32 %v952, 1.0
    %v1030 = vadd.f32 %v954, 1.0
    %v1031 = vadd.f32 %v956, 1.0
    %v1032 = vadd.f32 %v958, 1.0
    %v1033 = vadd.f32 %v960, 1.0
    %v1034 = vadd.f32 %v962, 1.0
    %v1035 = vadd.f32 %v964, 1.0
    %v1036 = vadd.f32 %v966, 1.0
    %v1037 = vadd.f32 %v968, 1.0
    %v1038 = vadd.f32 %v970, 1.0
    %v1039 = vadd.f32 %v972, 1.0
    %v1040 = vadd.f32 %v974, 1.0
    %v1041 = vadd.f32 %v976, 1.0
    %v1042 = vadd.f32 %v978, 1.0
    %v1043 = vrcp.pop %v979
    %v1044 = vrcp.pop %v980
    %v1045 = vrcp.pop %v981
    %v1046 = vrcp.pop %v982
    %v1047 = vrcp.pop %v983
    %v1048 = vrcp.pop %v984
    %v1049 = vrcp.pop %v985
    %v1050 = vrcp.pop %v986
    %v1051 = vrcp.pop %v987
    %v1052 = vrcp.pop %v988
    %v1053 = vrcp.pop %v989
    %v1054 = vrcp.pop %v990
    %v1055 = vrcp.pop %v991
    %v1056 = vrcp.pop %v992
    %v1057 = vrcp.pop %v993
    %v1058 = vrcp.pop %v994
    %v1059 = vrcp.pop %v995
    %v1060 = vrcp.pop %v996
    %v1061 = vrcp.pop %v997
    %v1062 = vrcp.pop %v998
    %v1063 = vrcp.pop %v999
    %v1064 = vrcp.pop %v1000
    %v1065 = vrcp.pop %v1001
    %v1066 = vrcp.pop %v1002
    %v1067 = vrcp.pop %v1003
    %v1068 = vrcp.pop %v1004
    %v1069 = vrcp.pop %v1005
    %v1070 = vrcp.pop %v1006
    %v1071 = vrcp.pop %v1007
    %v1072 = vrcp.pop %v1008
    %v1073 = vrcp.pop %v1009
    %v1074 = vrcp.pop %v1010
    %v1075 = vrcp.pop %v1011
    %v1076 = vrcp.pop %v1012
    %v1077 = vrcp.pop %v1013
    %v1078 = vrcp.pop %v1014
    %v1079 = vrcp.pop %v1015
    %v1080 = vrcp.pop %v1016
    %v1081 = vrcp.pop %v1017
    %v1082 = vrcp.pop %v1018
    %v1083 = vrcp.pop %v1019
    %v1084 = vrcp.pop %v1020
    %v1085 = vrcp.pop %v1021
    %v1086 = vrcp.pop %v1022
    %v1087 = vrcp.pop %v1023
    %v1088 = vrcp.pop %v1024
    %v1089 = vrcp.pop %v1025
    %v1090 = vrcp.pop %v1026
    %v1091 = vrcp.pop %v1027
    %v1092 = vrcp.pop %v1028
    %v1093 = vrcp.pop %v1029
    %v1094 = vrcp.pop %v1030
    %v1095 = vrcp.pop %v1031
    %v1096 = vrcp.pop %v1032
    %v1097 = vrcp.pop %v1033
    %v1098 = vrcp.pop %v1034
    %v1099 = vrcp.pop %v1035
    %v1100 = vrcp.pop %v1036
    %v1101 = vrcp.pop %v1037
    %v1102 = vrcp.pop %v1038
    %v1103 = vrcp.pop %v1039
    %v1104 = vrcp.pop %v1040
    %v1105 = vrcp.pop %v1041
    %v1106 = vrcp.pop %v1042
    %v1107 = vmul.f32 %v723, %v1043
    %v1108 = vmul.f32 %v724, %v1044
    %v1109 = vmul.f32 %v725, %v1045
    %v1110 = vmul.f32 %v726, %v1046
    %v1111 = vmul.f32 %v727, %v1047
    %v1112 = vmul.f32 %v728, %v1048
    %v1113 = vmul.f32 %v729, %v1049
    %v1114 = vmul.f32 %v730, %v1050
    %v1115 = vmul.f32 %v731, %v1051
    %v1116 = vmul.f32 %v732, %v1052
    %v1117 = vmul.f32 %v733, %v1053
    %v1118 = vmul.f32 %v734, %v1054
    %v1119 = vmul.f32 %v735, %v1055
    %v1120 = vmul.f32 %v736, %v1056
    %v1121 = vmul.f32 %v737, %v1057
    %v1122 = vmul.f32 %v738, %v1058
    %v1123 = vmul.f32 %v739, %v1059
    %v1124 = vmul.f32 %v740, %v1060
    %v1125 = vmul.f32 %v741, %v1061
    %v1126 = vmul.f32 %v742, %v1062
    %v1127 = vmul.f32 %v743, %v1063
    %v1128 = vmul.f32 %v744, %v1064
    %v1129 = vmul.f32 %v745, %v1065
    %v1130 = vmul.f32 %v746, %v1066
    %v1131 = vmul.f32 %v747, %v1067
    %v1132 = vmul.f32 %v748, %v1068
    %v1133 = vmul.f32 %v749, %v1069
    %v1134 = vmul.f32 %v750, %v1070
    %v1135 = vmul.f32 %v751, %v1071
    %v1136 = vmul.f32 %v752, %v1072
    %v1137 = vmul.f32 %v753, %v1073
    %v1138 = vmul.f32 %v754, %v1074
    %v1139 = vmul.f32 %v755, %v1075
    %v1140 = vmul.f32 %v756, %v1076
    %v1141 = vmul.f32 %v757, %v1077
    %v1142 = vmul.f32 %v758, %v1078
    %v1143 = vmul.f32 %v759, %v1079
    %v1144 = vmul.f32 %v760, %v1080
    %v1145 = vmul.f32 %v761, %v1081
    %v1146 = vmul.f32 %v762, %v1082
    %v1147 = vmul.f32 %v763, %v1083
    %v1148 = vmul.f32 %v764, %v1084
    %v1149 = vmul.f32 %v765, %v1085
    %v1150 = vmul.f32 %v766, %v1086
    %v1151 = vmul.f32 %v767, %v1087
    %v1152 = vmul.f32 %v768, %v1088
    %v1153 = vmul.f32 %v769, %v1089
    %v1154 = vmul.f32 %v770, %v1090
    %v1155 = vmul.f32 %v771, %v1091
    %v1156 = vmul.f32 %v772, %v1092
    %v1157 = vmul.f32 %v773, %v1093
    %v1158 = vmul.f32 %v774, %v1094
    %v1159 = vmul.f32 %v775, %v1095
    %v1160 = vmul.f32 %v776, %v1096
    %v1161 = vmul.f32 %v777, %v1097
    %v1162 = vmul.f32 %v778, %v1098
    %v1163 = vmul.f32 %v779, %v1099
    %v1164 = vmul.f32 %v780, %v1100
    %v1165 = vmul.f32 %v781, %v1101
    %v1166 = vmul.f32 %v782, %v1102
    %v1167 = vmul.f32 %v783, %v1103
    %v1168 = vmul.f32 %v784, %v1104
    %v1169 = vmul.f32 %v785, %v1105
    %v1170 = vmul.f32 %v786, %v1106
    %v1171 = vpack.c.bf16 %v1108, %v1107
    %v1172 = vpack.c.bf16 %v1110, %v1109
    %v1173 = vpack.c.bf16 %v1112, %v1111
    %v1174 = vpack.c.bf16 %v1114, %v1113
    %v1175 = vpack.c.bf16 %v1116, %v1115
    %v1176 = vpack.c.bf16 %v1118, %v1117
    %v1177 = vpack.c.bf16 %v1120, %v1119
    %v1178 = vpack.c.bf16 %v1122, %v1121
    %v1179 = vpack.c.bf16 %v1124, %v1123
    %v1180 = vpack.c.bf16 %v1126, %v1125
    %v1181 = vpack.c.bf16 %v1128, %v1127
    %v1182 = vpack.c.bf16 %v1130, %v1129
    %v1183 = vpack.c.bf16 %v1132, %v1131
    %v1184 = vpack.c.bf16 %v1134, %v1133
    %v1185 = vpack.c.bf16 %v1136, %v1135
    %v1186 = vpack.c.bf16 %v1138, %v1137
    %v1187 = vpack.c.bf16 %v1140, %v1139
    %v1188 = vpack.c.bf16 %v1142, %v1141
    %v1189 = vpack.c.bf16 %v1144, %v1143
    %v1190 = vpack.c.bf16 %v1146, %v1145
    %v1191 = vpack.c.bf16 %v1148, %v1147
    %v1192 = vpack.c.bf16 %v1150, %v1149
    %v1193 = vpack.c.bf16 %v1152, %v1151
    %v1194 = vpack.c.bf16 %v1154, %v1153
    %v1195 = vpack.c.bf16 %v1156, %v1155
    %v1196 = vpack.c.bf16 %v1158, %v1157
    %v1197 = vpack.c.bf16 %v1160, %v1159
    %v1198 = vpack.c.bf16 %v1162, %v1161
    %v1199 = vpack.c.bf16 %v1164, %v1163
    %v1200 = vpack.c.bf16 %v1166, %v1165
    %v1201 = vpack.c.bf16 %v1168, %v1167
    %v1202 = vpack.c.bf16 %v1170, %v1169
    %v1235 = vunpack.c.l.b16 %v1171
    %v1236 = vunpack.c.h.b16 %v1171
    %v1237 = vunpack.c.l.b16 %v1172
    %v1238 = vunpack.c.h.b16 %v1172
    %v1239 = vunpack.c.l.b16 %v1173
    %v1240 = vunpack.c.h.b16 %v1173
    %v1241 = vunpack.c.l.b16 %v1174
    %v1242 = vunpack.c.h.b16 %v1174
    %v1243 = vunpack.c.l.b16 %v1175
    %v1244 = vunpack.c.h.b16 %v1175
    %v1245 = vunpack.c.l.b16 %v1176
    %v1246 = vunpack.c.h.b16 %v1176
    %v1247 = vunpack.c.l.b16 %v1177
    %v1248 = vunpack.c.h.b16 %v1177
    %v1249 = vunpack.c.l.b16 %v1178
    %v1250 = vunpack.c.h.b16 %v1178
    %v1251 = vunpack.c.l.b16 %v1179
    %v1252 = vunpack.c.h.b16 %v1179
    %v1253 = vunpack.c.l.b16 %v1180
    %v1254 = vunpack.c.h.b16 %v1180
    %v1255 = vunpack.c.l.b16 %v1181
    %v1256 = vunpack.c.h.b16 %v1181
    %v1257 = vunpack.c.l.b16 %v1182
    %v1258 = vunpack.c.h.b16 %v1182
    %v1259 = vunpack.c.l.b16 %v1183
    %v1260 = vunpack.c.h.b16 %v1183
    %v1261 = vunpack.c.l.b16 %v1184
    %v1262 = vunpack.c.h.b16 %v1184
    %v1263 = vunpack.c.l.b16 %v1185
    %v1264 = vunpack.c.h.b16 %v1185
    %v1265 = vunpack.c.l.b16 %v1186
    %v1266 = vunpack.c.h.b16 %v1186
    %v1267 = vunpack.c.l.b16 %v1187
    %v1268 = vunpack.c.h.b16 %v1187
    %v1269 = vunpack.c.l.b16 %v1188
    %v1270 = vunpack.c.h.b16 %v1188
    %v1271 = vunpack.c.l.b16 %v1189
    %v1272 = vunpack.c.h.b16 %v1189
    %v1273 = vunpack.c.l.b16 %v1190
    %v1274 = vunpack.c.h.b16 %v1190
    %v1275 = vunpack.c.l.b16 %v1191
    %v1276 = vunpack.c.h.b16 %v1191
    %v1277 = vunpack.c.l.b16 %v1192
    %v1278 = vunpack.c.h.b16 %v1192
    %v1279 = vunpack.c.l.b16 %v1193
    %v1280 = vunpack.c.h.b16 %v1193
    %v1281 = vunpack.c.l.b16 %v1194
    %v1282 = vunpack.c.h.b16 %v1194
    %v1283 = vunpack.c.l.b16 %v1195
    %v1284 = vunpack.c.h.b16 %v1195
    %v1285 = vunpack.c.l.b16 %v1196
    %v1286 = vunpack.c.h.b16 %v1196
    %v1287 = vunpack.c.l.b16 %v1197
    %v1288 = vunpack.c.h.b16 %v1197
    %v1289 = vunpack.c.l.b16 %v1198
    %v1290 = vunpack.c.h.b16 %v1198
    %v1291 = vunpack.c.l.b16 %v1199
    %v1292 = vunpack.c.h.b16 %v1199
    %v1293 = vunpack.c.l.b16 %v1200
    %v1294 = vunpack.c.h.b16 %v1200
    %v1295 = vunpack.c.l.b16 %v1201
    %v1296 = vunpack.c.h.b16 %v1201
    %v1297 = vunpack.c.l.b16 %v1202
    %v1298 = vunpack.c.h.b16 %v1202
    %v1299 = vpack.c.b16 %v1235, %v1235
    %v1300 = vpack.c.b16 %v1236, %v1236
    %v1301 = vpack.c.b16 %v1237, %v1237
    %v1302 = vpack.c.b16 %v1238, %v1238
    %v1303 = vpack.c.b16 %v1239, %v1239
    %v1304 = vpack.c.b16 %v1240, %v1240
    %v1305 = vpack.c.b16 %v1241, %v1241
    %v1306 = vpack.c.b16 %v1242, %v1242
    %v1307 = vpack.c.b16 %v1243, %v1243
    %v1308 = vpack.c.b16 %v1244, %v1244
    %v1309 = vpack.c.b16 %v1245, %v1245
    %v1310 = vpack.c.b16 %v1246, %v1246
    %v1311 = vpack.c.b16 %v1247, %v1247
    %v1312 = vpack.c.b16 %v1248, %v1248
    %v1313 = vpack.c.b16 %v1249, %v1249
    %v1314 = vpack.c.b16 %v1250, %v1250
    %v1315 = vpack.c.b16 %v1251, %v1251
    %v1316 = vpack.c.b16 %v1252, %v1252
    %v1317 = vpack.c.b16 %v1253, %v1253
    %v1318 = vpack.c.b16 %v1254, %v1254
    %v1319 = vpack.c.b16 %v1255, %v1255
    %v1320 = vpack.c.b16 %v1256, %v1256
    %v1321 = vpack.c.b16 %v1257, %v1257
    %v1322 = vpack.c.b16 %v1258, %v1258
    %v1323 = vpack.c.b16 %v1259, %v1259
    %v1324 = vpack.c.b16 %v1260, %v1260
    %v1325 = vpack.c.b16 %v1261, %v1261
    %v1326 = vpack.c.b16 %v1262, %v1262
    %v1327 = vpack.c.b16 %v1263, %v1263
    %v1328 = vpack.c.b16 %v1264, %v1264
    %v1329 = vpack.c.b16 %v1265, %v1265
    %v1330 = vpack.c.b16 %v1266, %v1266
    %v1331 = vpack.c.b16 %v1267, %v1267
    %v1332 = vpack.c.b16 %v1268, %v1268
    %v1333 = vpack.c.b16 %v1269, %v1269
    %v1334 = vpack.c.b16 %v1270, %v1270
    %v1335 = vpack.c.b16 %v1271, %v1271
    %v1336 = vpack.c.b16 %v1272, %v1272
    %v1337 = vpack.c.b16 %v1273, %v1273
    %v1338 = vpack.c.b16 %v1274, %v1274
    %v1339 = vpack.c.b16 %v1275, %v1275
    %v1340 = vpack.c.b16 %v1276, %v1276
    %v1341 = vpack.c.b16 %v1277, %v1277
    %v1342 = vpack.c.b16 %v1278, %v1278
    %v1343 = vpack.c.b16 %v1279, %v1279
    %v1344 = vpack.c.b16 %v1280, %v1280
    %v1345 = vpack.c.b16 %v1281, %v1281
    %v1346 = vpack.c.b16 %v1282, %v1282
    %v1347 = vpack.c.b16 %v1283, %v1283
    %v1348 = vpack.c.b16 %v1284, %v1284
    %v1349 = vpack.c.b16 %v1285, %v1285
    %v1350 = vpack.c.b16 %v1286, %v1286
    %v1351 = vpack.c.b16 %v1287, %v1287
    %v1352 = vpack.c.b16 %v1288, %v1288
    %v1353 = vpack.c.b16 %v1289, %v1289
    %v1354 = vpack.c.b16 %v1290, %v1290
    %v1355 = vpack.c.b16 %v1291, %v1291
    %v1356 = vpack.c.b16 %v1292, %v1292
    %v1357 = vpack.c.b16 %v1293, %v1293
    %v1358 = vpack.c.b16 %v1294, %v1294
    %v1359 = vpack.c.b16 %v1295, %v1295
    %v1360 = vpack.c.b16 %v1296, %v1296
    %v1361 = vpack.c.b16 %v1297, %v1297
    %v1362 = vpack.c.b16 %v1298, %v1298
    %1427 = vst [vmem:[#allocation2] sm:$0xf] %v1299
    %1428 = vst [vmem:[#allocation2 + $0x4] sm:$0xf] %v1300
    %1429 = vst [vmem:[#allocation2 + $0x8] sm:$0xf] %v1301
    %1430 = vst [vmem:[#allocation2 + $0xc] sm:$0xf] %v1302
    %1431 = vst [vmem:[#allocation2 + $0x10] sm:$0xf] %v1303
    %1432 = vst [vmem:[#allocation2 + $0x14] sm:$0xf] %v1304
    %1433 = vst [vmem:[#allocation2 + $0x18] sm:$0xf] %v1305
    %1434 = vst [vmem:[#allocation2 + $0x1c] sm:$0xf] %v1306
    %1435 = vst [vmem:[#allocation2 + $0x20] sm:$0xf] %v1307
    %1436 = vst [vmem:[#allocation2 + $0x24] sm:$0xf] %v1308
    %1437 = vst [vmem:[#allocation2 + $0x28] sm:$0xf] %v1309
    %1438 = vst [vmem:[#allocation2 + $0x2c] sm:$0xf] %v1310
    %1439 = vst [vmem:[#allocation2 + $0x30] sm:$0xf] %v1311
    %1440 = vst [vmem:[#allocation2 + $0x34] sm:$0xf] %v1312
    %1441 = vst [vmem:[#allocation2 + $0x38] sm:$0xf] %v1313
    %1442 = vst [vmem:[#allocation2 + $0x3c] sm:$0xf] %v1314
    %1443 = vst [vmem:[#allocation2 + $0x40] sm:$0xf] %v1315
    %1444 = vst [vmem:[#allocation2 + $0x44] sm:$0xf] %v1316
    %1445 = vst [vmem:[#allocation2 + $0x48] sm:$0xf] %v1317
    %1446 = vst [vmem:[#allocation2 + $0x4c] sm:$0xf] %v1318
    %1447 = vst [vmem:[#allocation2 + $0x50] sm:$0xf] %v1319
    %1448 = vst [vmem:[#allocation2 + $0x54] sm:$0xf] %v1320
    %1449 = vst [vmem:[#allocation2 + $0x58] sm:$0xf] %v1321
    %1450 = vst [vmem:[#allocation2 + $0x5c] sm:$0xf] %v1322
    %1451 = vst [vmem:[#allocation2 + $0x60] sm:$0xf] %v1323
    %1452 = vst [vmem:[#allocation2 + $0x64] sm:$0xf] %v1324
    %1453 = vst [vmem:[#allocation2 + $0x68] sm:$0xf] %v1325
    %1454 = vst [vmem:[#allocation2 + $0x6c] sm:$0xf] %v1326
    %1455 = vst [vmem:[#allocation2 + $0x70] sm:$0xf] %v1327
    %1456 = vst [vmem:[#allocation2 + $0x74] sm:$0xf] %v1328
    %1457 = vst [vmem:[#allocation2 + $0x78] sm:$0xf] %v1329
    %1458 = vst [vmem:[#allocation2 + $0x7c] sm:$0xf] %v1330
    %1459 = vst [vmem:[#allocation2 + $0x80] sm:$0xf] %v1331
    %1460 = vst [vmem:[#allocation2 + $0x84] sm:$0xf] %v1332
    %1461 = vst [vmem:[#allocation2 + $0x88] sm:$0xf] %v1333
    %1462 = vst [vmem:[#allocation2 + $0x8c] sm:$0xf] %v1334
    %1463 = vst [vmem:[#allocation2 + $0x90] sm:$0xf] %v1335
    %1464 = vst [vmem:[#allocation2 + $0x94] sm:$0xf] %v1336
    %1465 = vst [vmem:[#allocation2 + $0x98] sm:$0xf] %v1337
    %1466 = vst [vmem:[#allocation2 + $0x9c] sm:$0xf] %v1338
    %1467 = vst [vmem:[#allocation2 + $0xa0] sm:$0xf] %v1339
    %1468 = vst [vmem:[#allocation2 + $0xa4] sm:$0xf] %v1340
    %1469 = vst [vmem:[#allocation2 + $0xa8] sm:$0xf] %v1341
    %1470 = vst [vmem:[#allocation2 + $0xac] sm:$0xf] %v1342
    %1471 = vst [vmem:[#allocation2 + $0xb0] sm:$0xf] %v1343
    %1472 = vst [vmem:[#allocation2 + $0xb4] sm:$0xf] %v1344
    %1473 = vst [vmem:[#allocation2 + $0xb8] sm:$0xf] %v1345
    %1474 = vst [vmem:[#allocation2 + $0xbc] sm:$0xf] %v1346
    %1475 = vst [vmem:[#allocation2 + $0xc0] sm:$0xf] %v1347
    %1476 = vst [vmem:[#allocation2 + $0xc4] sm:$0xf] %v1348
    %1477 = vst [vmem:[#allocation2 + $0xc8] sm:$0xf] %v1349
    %1478 = vst [vmem:[#allocation2 + $0xcc] sm:$0xf] %v1350
    %1479 = vst [vmem:[#allocation2 + $0xd0] sm:$0xf] %v1351
    %1480 = vst [vmem:[#allocation2 + $0xd4] sm:$0xf] %v1352
    %1481 = vst [vmem:[#allocation2 + $0xd8] sm:$0xf] %v1353
    %1482 = vst [vmem:[#allocation2 + $0xdc] sm:$0xf] %v1354
    %1483 = vst [vmem:[#allocation2 + $0xe0] sm:$0xf] %v1355
    %1484 = vst [vmem:[#allocation2 + $0xe4] sm:$0xf] %v1356
    %1485 = vst [vmem:[#allocation2 + $0xe8] sm:$0xf] %v1357
    %1486 = vst [vmem:[#allocation2 + $0xec] sm:$0xf] %v1358
    %1487 = vst [vmem:[#allocation2 + $0xf0] sm:$0xf] %v1359
    %1488 = vst [vmem:[#allocation2 + $0xf4] sm:$0xf] %v1360
    %1489 = vst [vmem:[#allocation2 + $0xf8] sm:$0xf] %v1361
    %1490 = vst [vmem:[#allocation2 + $0xfc] sm:$0xf] %v1362
    // Predicated region
    $region18: #{tpu_custom_call.1} parent=1 // pred_check
      _
    $region19: #{tpu_custom_call.1} parent=1 // pred_check_branch
      %1492 = sbr.rel (0) target = $region21
    $region20: #{tpu_custom_call.1} parent=1 // pred_region
      %s1494 = ssub.s32 4096, 4096
      %1495 = vsyncadd [#allocation3], %s1494
      %s1496 = sshll.u32 [#allocation2], 4
      %s1497 = int_to_ptr.vmem [resolvable:$true] %s1496
      %1502 = dma.vmem_to_hbm [thread:$0]  %s1497, 4096, %s4, [#allocation3], 64, 64, 4
    $region21: #{tpu_custom_call.1} parent=1 // pred_fallthru
      _
    // Predicated region
    $region22: #{tpu_custom_call.1} parent=1 // pred_check
      _
    $region23: #{tpu_custom_call.1} parent=1 // pred_check_branch
      %1504 = sbr.rel (0) target = $region25
    $region24: #{tpu_custom_call.1} parent=1 // pred_region
      %1505 = dma.done [#allocation3], 4096
    $region25: #{tpu_custom_call.1} parent=1 // pred_fallthru
      _
    %1506 = vsyncpa [#allocation3], 1

</llo_original>
